<compile_context>
chip_gen: v6e
topology: v6e:2x2x1
jax: 0.10.0
libtpu: 0.0.40
codegen_flags: <defaults>
</compile_context>

<pallas_src>
import functools

import jax
import jax.numpy as jnp
from jax import lax
from jax.experimental import pallas as pl
from jax.experimental.pallas import tpu as pltpu

HID_PAD = 128     # hidden size 32, zero-padded to a full 128-lane vreg width
TB_MAX = 2048     # max batch-tile rows per grid step (multiple of 128)


def _round_up(n, m):
    return ((n + m - 1) // m) * m


def _cdiv(a, b):
    return -(-a // b)


def _choose_tiles(batch):
    """Pick (num_grid_steps, batch_tile). Tile is a multiple of 128 (output
    batch axis is lane-dense); step count is even (>=2) for any non-trivial
    batch so both v7x TensorCores get work; tail padding is minimized."""
    b128 = _round_up(max(batch, 1), 128)
    n = _cdiv(b128, TB_MAX)
    if b128 > 128:
        n = max(n, 2)            # use both TCs on v7x (no-op on v5e/v6e)
    if n > 1 and n % 2:
        n += 1                   # even split across the two cores
    tb = _round_up(_cdiv(b128, n), 128)
    return n, tb


def _policy_kernel(x_ref, w1_ref, b1_ref, wh_ref, bh_ref, out_ref, *,
                   action_space):
    x = x_ref[...]                                                 # [tb, S]

    # fc1 + ReLU (hidden padded to 128 lanes; padded cols are exactly 0).
    h = jnp.dot(x, w1_ref[...], preferred_element_type=jnp.float32) + b1_ref[...]
    h = jnp.maximum(h, 0.0)                                        # [tb, 128]

    # Fused heads, transposed result: head[r, b] = sum_k wh[r, k] * h[b, k].
    # Contract the hidden dim of both operands (q@k^T pattern) -> [HR, tb].
    head = lax.dot_general(
        wh_ref[...], h, (((1,), (1,)), ((), ())),
        preferred_element_type=jnp.float32) + bh_ref[...]          # [HR, tb]

    row = lax.broadcasted_iota(jnp.int32, head.shape, 0)           # [HR, tb]
    is_logit = row < action_space

    # Numerically stable softmax over the first A sublanes (per batch column).
    logits = jnp.where(is_logit, head, jnp.float32(-1e30))
    m = jnp.max(logits, axis=0, keepdims=True)                     # [1, tb]
    e = jnp.exp(logits - m)                                        # padded rows -> 0
    denom = jnp.sum(e, axis=0, keepdims=True)
    probs = e / denom                                              # exact divide

    # Compact feature-major slab: probs in rows < A, raw value in row A,
    # zeros elsewhere.  Split happens in the wrapper.
    out_ref[...] = jnp.where(row == action_space, head, probs)


def policy_forward(x, packed):
    """x: [B, state_space] float32. packed: output of pack_params()."""
    A = packed["A"]
    HR = packed["HEAD_ROWS"]
    B, S = x.shape

    n, tb = _choose_tiles(B)
    Bp = n * tb
    if Bp != B:
        x = jnp.pad(x, ((0, Bp - B), (0, 0)))

    flops = 2 * Bp * (S * HID_PAD + HID_PAD * HR)
    bytes_accessed = 4 * (Bp * S + HR * Bp
                          + n * (S * HID_PAD + HID_PAD + HR * HID_PAD + HR))
    cost = pl.CostEstimate(flops=flops,
                           transcendentals=Bp * HR,
                           bytes_accessed=bytes_accessed)

    kernel = functools.partial(_policy_kernel, action_space=A)
    slab = pl.pallas_call(
        kernel,
        out_shape=jax.ShapeDtypeStruct((HR, Bp), jnp.float32),
        grid=(n,),
        in_specs=[
            pl.BlockSpec((tb, S), lambda i: (i, 0)),               # x tile
            pl.BlockSpec((S, HID_PAD), lambda i: (0, 0)),          # w1 (resident)
            pl.BlockSpec((1, HID_PAD), lambda i: (0, 0)),          # b1
            pl.BlockSpec((HR, HID_PAD), lambda i: (0, 0)),         # fused head W
            pl.BlockSpec((HR, 1), lambda i: (0, 0)),               # fused head b
        ],
        out_specs=pl.BlockSpec((HR, tb), lambda i: (0, i)),
        compiler_params=pltpu.CompilerParams(
            dimension_semantics=("parallel",),
            vmem_limit_bytes=32 * 1024 * 1024),
        cost_estimate=cost,
    )(x, packed["w1p"], packed["b1p"], packed["whp"], packed["bhp"])

    probs = slab[:A, :B].T                 # [B, A]
    value = slab[A:A + 1, :B].T            # [B, 1]
    return probs, value


def init_params(key, state_space, action_space, hidden=32):
    """Logical parameters (weights stored as [in, out] = PyTorch weight.T)."""
    k1, k2, k3, k4, k5, k6 = jax.random.split(key, 6)

    def u(k, shape, fan_in):
        bound = 1.0 / jnp.sqrt(float(fan_in))
        return jax.random.uniform(k, shape, jnp.float32, -bound, bound)

    return {
        "w1": u(k1, (state_space, hidden), state_space),
        "b1": u(k2, (hidden,), state_space),
        "wa": u(k3, (hidden, action_space), hidden),
        "ba": u(k4, (action_space,), hidden),
        "wv": u(k5, (hidden, 1), hidden),
        "bv": u(k6, (1,), hidden),
    }


def pack_params(params):
    """One-time repack: zero-pad fc1 to a 128-lane hidden layout and fuse the
    action/value heads into a single transposed [HEAD_ROWS, 128] weight."""
    S, H = params["w1"].shape
    A = params["wa"].shape[1]
    head_rows = _round_up(A + 1, 8)
    assert H <= HID_PAD

    w1p = jnp.zeros((S, HID_PAD), jnp.float32).at[:, :H].set(params["w1"])
    b1p = jnp.zeros((1, HID_PAD), jnp.float32).at[0, :H].set(params["b1"])

    whp = jnp.zeros((head_rows, HID_PAD), jnp.float32)
    whp = whp.at[:A, :H].set(params["wa"].T).at[A, :H].set(params["wv"][:, 0])
    bhp = jnp.zeros((head_rows, 1), jnp.float32)
    bhp = bhp.at[:A, 0].set(params["ba"]).at[A, 0].set(params["bv"][0])

    return {"w1p": w1p, "b1p": b1p, "whp": whp, "bhp": bhp,
            "A": A, "HEAD_ROWS": head_rows}


def reference_forward(x, params):
    hi = jax.lax.Precision.HIGHEST
    h = jnp.maximum(jnp.dot(x, params["w1"], precision=hi) + params["b1"], 0.0)
    logits = jnp.dot(h, params["wa"], precision=hi) + params["ba"]
    probs = jax.nn.softmax(logits, axis=-1)
    value = jnp.dot(h, params["wv"], precision=hi) + params["bv"]
    return probs, value


if __name__ == "__main__":
    key = jax.random.PRNGKey(0)
    kx, kp, kx2 = jax.random.split(key, 3)

    batch, state_space, action_space = 2, 4, 2   # CartPole-like sizes
    params = init_params(kp, state_space, action_space)
    packed = pack_params(params)

    # Small batch (single grid step, 128-lane padded batch).
    x = jax.random.normal(kx, (batch, state_space), dtype=jnp.float32)
    probs, value = jax.block_until_ready(policy_forward(x, packed))

    ref_probs, ref_value = reference_forward(x, params)
    assert probs.shape == (batch, action_space)
    assert value.shape == (batch, 1)
    assert jnp.allclose(probs, ref_probs, atol=1e-4, rtol=1e-4)
    assert jnp.allclose(value, ref_value, atol=1e-4, rtol=1e-4)
    assert jnp.allclose(jnp.sum(probs, axis=-1), 1.0, atol=1e-5)

    # Larger batch exercising the even, multi-step (parallel) grid with padding.
    big_b = 600
    xb = jax.random.normal(kx2, (big_b, state_space), dtype=jnp.float32)
    pb, vb = jax.block_until_ready(policy_forward(xb, packed))
    rpb, rvb = reference_forward(xb, params)
    assert pb.shape == (big_b, action_space) and vb.shape == (big_b, 1)
    assert jnp.allclose(pb, rpb, atol=1e-4, rtol=1e-4)
    assert jnp.allclose(vb, rvb, atol=1e-4, rtol=1e-4)
    assert jnp.allclose(jnp.sum(pb, axis=-1), 1.0, atol=1e-5)

    print("KERNEL_OK")
</pallas_src>

<mosaic_0001>
module attributes {stable_mosaic.version = 11 : i64} {
  func.func @_policy_kernel(%arg0: i32, %arg1: memref<128x4xf32, #tpu.memory_space<vmem>>, %arg2: memref<4x128xf32, #tpu.memory_space<vmem>>, %arg3: memref<1x128xf32, #tpu.memory_space<vmem>>, %arg4: memref<8x128xf32, #tpu.memory_space<vmem>>, %arg5: memref<8x1xf32, #tpu.memory_space<vmem>>, %arg6: memref<8x128xf32, #tpu.memory_space<vmem>>) attributes {dimension_semantics = [#tpu.dimension_semantics<parallel>], iteration_bounds = array<i64: 1>, scalar_prefetch = 0 : i64, scratch_operands = 0 : i64, tpu.core_type = #tpu.core_type<tc>, window_params = [{transform_indices = @transform_0, window_bounds = array<i64: 128, 4>}, {pipeline_mode = #tpu.pipeline_mode<synchronous>, transform_indices = @transform_1, window_bounds = array<i64: 4, 128>}, {pipeline_mode = #tpu.pipeline_mode<synchronous>, transform_indices = @transform_2, window_bounds = array<i64: 1, 128>}, {pipeline_mode = #tpu.pipeline_mode<synchronous>, transform_indices = @transform_3, window_bounds = array<i64: 8, 128>}, {pipeline_mode = #tpu.pipeline_mode<synchronous>, transform_indices = @transform_4, window_bounds = array<i64: 8, 1>}, {transform_indices = @transform_5, window_bounds = array<i64: 8, 128>}]} {
    %c0 = arith.constant 0 : index
    %c0_0 = arith.constant 0 : index
    %0 = vector.load %arg1[%c0, %c0_0] : memref<128x4xf32, #tpu.memory_space<vmem>>, vector<128x4xf32>
    %c0_1 = arith.constant 0 : index
    %c0_2 = arith.constant 0 : index
    %1 = vector.load %arg2[%c0_1, %c0_2] : memref<4x128xf32, #tpu.memory_space<vmem>>, vector<4x128xf32>
    %cst = arith.constant dense<0.000000e+00> : vector<128x128xf32>
    %2 = tpu.matmul %0, %1, %cst {dimension_numbers = #tpu.dot_dimension_numbers<[1], [0], [0], [1], [0, 0, 1, 1], [], []>} : vector<128x4xf32>, vector<4x128xf32>, vector<128x128xf32> -> vector<128x128xf32>
    %c0_3 = arith.constant 0 : index
    %c0_4 = arith.constant 0 : index
    %3 = vector.load %arg3[%c0_3, %c0_4] : memref<1x128xf32, #tpu.memory_space<vmem>>, vector<1x128xf32>
    %4 = vector.broadcast %3 : vector<1x128xf32> to vector<128x128xf32>
    %5 = arith.addf %2, %4 : vector<128x128xf32>
    %cst_5 = arith.constant 0.000000e+00 : f32
    %6 = vector.broadcast %cst_5 : f32 to vector<128x128xf32>
    %7 = arith.maximumf %5, %6 : vector<128x128xf32>
    %c0_6 = arith.constant 0 : index
    %c0_7 = arith.constant 0 : index
    %8 = vector.load %arg4[%c0_6, %c0_7] : memref<8x128xf32, #tpu.memory_space<vmem>>, vector<8x128xf32>
    %cst_8 = arith.constant dense<0.000000e+00> : vector<8x128xf32>
    %9 = tpu.matmul %8, %7, %cst_8 {dimension_numbers = #tpu.dot_dimension_numbers<[1], [1], [0], [0], [0, 0, 1, 0], [], []>} : vector<8x128xf32>, vector<128x128xf32>, vector<8x128xf32> -> vector<8x128xf32>
    %c0_9 = arith.constant 0 : index
    %c0_10 = arith.constant 0 : index
    %10 = vector.load %arg5[%c0_9, %c0_10] : memref<8x1xf32, #tpu.memory_space<vmem>>, vector<8x1xf32>
    %11 = vector.broadcast %10 : vector<8x1xf32> to vector<8x128xf32>
    %12 = arith.addf %9, %11 : vector<8x128xf32>
    %13 = tpu.iota {dimensions = array<i32: 0>} : vector<8x128xi32>
    %c2_i32 = arith.constant 2 : i32
    %14 = vector.broadcast %c2_i32 : i32 to vector<8x128xi32>
    %15 = arith.cmpi slt, %13, %14 : vector<8x128xi32>
    %cst_11 = arith.constant -1.000000e+30 : f32
    %16 = vector.broadcast %cst_11 : f32 to vector<8x128xf32>
    %17 = arith.select %15, %12, %16 : vector<8x128xi1>, vector<8x128xf32>
    %cst_12 = arith.constant dense<0xFF800000> : vector<128xf32>
    %18 = vector.multi_reduction <maximumf>, %17, %cst_12 [0] : vector<8x128xf32> to vector<128xf32>
    %19 = vector.shape_cast %18 : vector<128xf32> to vector<1x128xf32>
    %20 = vector.broadcast %19 : vector<1x128xf32> to vector<8x128xf32>
    %21 = arith.subf %17, %20 : vector<8x128xf32>
    %22 = math.exp %21 : vector<8x128xf32>
    %cst_13 = arith.constant dense<0.000000e+00> : vector<128xf32>
    %23 = vector.multi_reduction <add>, %22, %cst_13 [0] : vector<8x128xf32> to vector<128xf32>
    %24 = vector.shape_cast %23 : vector<128xf32> to vector<1x128xf32>
    %25 = vector.broadcast %24 : vector<1x128xf32> to vector<8x128xf32>
    %26 = arith.divf %22, %25 : vector<8x128xf32>
    %c2_i32_14 = arith.constant 2 : i32
    %27 = vector.broadcast %c2_i32_14 : i32 to vector<8x128xi32>
    %28 = arith.cmpi eq, %13, %27 : vector<8x128xi32>
    %29 = arith.select %28, %12, %26 : vector<8x128xi1>, vector<8x128xf32>
    %c0_15 = arith.constant 0 : index
    %c0_16 = arith.constant 0 : index
    %30 = vector.load %arg6[%c0_15, %c0_16] : memref<8x128xf32, #tpu.memory_space<vmem>>, vector<8x128xf32>
    tpu.vector_store %arg6[%c0_15, %c0_16], %29 {strides = array<i32>} : memref<8x128xf32, #tpu.memory_space<vmem>>, vector<8x128xf32>,
    return
  }
  func.func @transform_0(%arg0: i32) -> (i32, i32) {
    %c0_i32 = arith.constant 0 : i32
    %c0_i32_0 = arith.constant 0 : i32
    return %arg0, %c0_i32 : i32, i32
  }
  func.func @transform_1(%arg0: i32) -> (i32, i32) {
    %c0_i32 = arith.constant 0 : i32
    %c0_i32_0 = arith.constant 0 : i32
    %c0_i32_1 = arith.constant 0 : i32
    return %c0_i32, %c0_i32_0 : i32, i32
  }
  func.func @transform_2(%arg0: i32) -> (i32, i32) {
    %c0_i32 = arith.constant 0 : i32
    %c0_i32_0 = arith.constant 0 : i32
    %c0_i32_1 = arith.constant 0 : i32
    return %c0_i32, %c0_i32_0 : i32, i32
  }
  func.func @transform_3(%arg0: i32) -> (i32, i32) {
    %c0_i32 = arith.constant 0 : i32
    %c0_i32_0 = arith.constant 0 : i32
    %c0_i32_1 = arith.constant 0 : i32
    return %c0_i32, %c0_i32_0 : i32, i32
  }
  func.func @transform_4(%arg0: i32) -> (i32, i32) {
    %c0_i32 = arith.constant 0 : i32
    %c0_i32_0 = arith.constant 0 : i32
    %c0_i32_1 = arith.constant 0 : i32
    return %c0_i32, %c0_i32_0 : i32, i32
  }
  func.func @transform_5(%arg0: i32) -> (i32, i32) {
    %c0_i32 = arith.constant 0 : i32
    %c0_i32_0 = arith.constant 0 : i32
    return %c0_i32, %arg0 : i32, i32
  }
}

</mosaic_0001>

<llo_original>
// kernel: tpu_custom_call.1
$region0: #{tpu_custom_call.1}
  #allocation0 [shape = 'u32[]', space=smem, size = 0x4, offset = 0x4, fixed_abs, tag = 'smem constant byte address 0x4 - core index']
  #allocation1 [shape = 'u32[144,128]{1,0:T(1,128)}', space=vmem, size = 0x12000, scoped, tag = 'internal scratch']
  %s0 = inlined_call_operand.vmem [shape: f32[128,4], index: 0, kind: input, shape index: {}]
  %s1 = inlined_call_operand.vmem [shape: f32[4,128], index: 1, kind: input, shape index: {}]
  %s2 = inlined_call_operand.vmem [shape: f32[1,128], index: 2, kind: input, shape index: {}]
  %s3 = inlined_call_operand.vmem [shape: f32[8,128], index: 3, kind: input, shape index: {}]
  %s4 = inlined_call_operand.vmem [shape: f32[8,1], index: 4, kind: input, shape index: {}]
  %s5 = inlined_call_operand.hbm [shape: f32[8,128], index: 5, kind: output, shape index: {}]
  %s6 = sld [smem:[#allocation0]]
  $region30: #{tpu_custom_call.1} parent=0
    _
  %s8 = ssub.s32 1, %s6
  %s9 = scalar_select 0, %s8, %s6
  $region1: #{tpu_custom_call.1} parent=0
    #allocation2 [shape = 'u8[4096]{0}', space=vmem, size = 0x1000, scoped, tag = 'output window, operand 0, single buffered']
    #allocation3 [shape = 's32[1]{0}', space=sflag, size = 0x4, scoped, tag = 'scoped memory for tpu_custom_call.1']
    %10 = vsyncpa [#allocation3], 0
    // Predicated region
    $region2: #{tpu_custom_call.1} parent=1 // pred_check
      _
    $region3: #{tpu_custom_call.1} parent=1 // pred_check_branch
      %12 = sbr.rel (0) target = $region5
    $region4: #{tpu_custom_call.1} parent=1 // pred_region
      _
    $region5: #{tpu_custom_call.1} parent=1 // pred_fallthru
      _
    // Predicated region
    $region6: #{tpu_custom_call.1} parent=1 // pred_check
      _
    $region7: #{tpu_custom_call.1} parent=1 // pred_check_branch
      %14 = sbr.rel (0) target = $region9
    $region8: #{tpu_custom_call.1} parent=1 // pred_region
      _
    $region9: #{tpu_custom_call.1} parent=1 // pred_fallthru
      _
    // Predicated region
    $region10: #{tpu_custom_call.1} parent=1 // pred_check
      _
    $region11: #{tpu_custom_call.1} parent=1 // pred_check_branch
      %16 = sbr.rel (0) target = $region13
    $region12: #{tpu_custom_call.1} parent=1 // pred_region
      _
    $region13: #{tpu_custom_call.1} parent=1 // pred_fallthru
      _
    // Predicated region
    $region14: #{tpu_custom_call.1} parent=1 // pred_check
      _
    $region15: #{tpu_custom_call.1} parent=1 // pred_check_branch
      %18 = sbr.rel (0) target = $region17
    $region16: #{tpu_custom_call.1} parent=1 // pred_region
      _
    $region17: #{tpu_custom_call.1} parent=1 // pred_fallthru
      _
    // Predicated region
    $region18: #{tpu_custom_call.1} parent=1 // pred_check
      _
    $region19: #{tpu_custom_call.1} parent=1 // pred_check_branch
      %20 = sbr.rel (0) target = $region21
    $region20: #{tpu_custom_call.1} parent=1 // pred_region
      _
    $region21: #{tpu_custom_call.1} parent=1 // pred_fallthru
      _
    %v21 = vld [vmem:[%s0] sm:$0xff]
    %v22 = vld [vmem:[%s0 + $0x8] sm:$0xff]
    %v23 = vld [vmem:[%s0 + $0x10] sm:$0xff]
    %v24 = vld [vmem:[%s0 + $0x18] sm:$0xff]
    %v25 = vld [vmem:[%s0 + $0x20] sm:$0xff]
    %v26 = vld [vmem:[%s0 + $0x28] sm:$0xff]
    %v27 = vld [vmem:[%s0 + $0x30] sm:$0xff]
    %v28 = vld [vmem:[%s0 + $0x38] sm:$0xff]
    %v29 = vld [vmem:[%s0 + $0x40] sm:$0xff]
    %v30 = vld [vmem:[%s0 + $0x48] sm:$0xff]
    %v31 = vld [vmem:[%s0 + $0x50] sm:$0xff]
    %v32 = vld [vmem:[%s0 + $0x58] sm:$0xff]
    %v33 = vld [vmem:[%s0 + $0x60] sm:$0xff]
    %v34 = vld [vmem:[%s0 + $0x68] sm:$0xff]
    %v35 = vld [vmem:[%s0 + $0x70] sm:$0xff]
    %v36 = vld [vmem:[%s0 + $0x78] sm:$0xff]
    %v37 = vld [vmem:[%s1] sm:$0xf]
    %v38 = vld [vmem:[%s2] sm:$0x1]
    %v40 = vlaneseq
    %v41 = vshrl.u32 %v40, 7
    %v42 = vsub.s32 0, %v41
    %v43 = vrot.slane %v38, %v42
    %vm45 = vcmask 31744
    %v47 = vsel %vm45, %v21, 0
    %v50 = vsel %vm45, %v22, 0
    %v53 = vsel %vm45, %v23, 0
    %v56 = vsel %vm45, %v24, 0
    %v59 = vsel %vm45, %v25, 0
    %v62 = vsel %vm45, %v26, 0
    %v65 = vsel %vm45, %v27, 0
    %v68 = vsel %vm45, %v28, 0
    %v71 = vsel %vm45, %v29, 0
    %v74 = vsel %vm45, %v30, 0
    %v77 = vsel %vm45, %v31, 0
    %v80 = vsel %vm45, %v32, 0
    %v83 = vsel %vm45, %v33, 0
    %v86 = vsel %vm45, %v34, 0
    %v89 = vsel %vm45, %v35, 0
    %v92 = vsel %vm45, %v36, 0
    %vm94 = vcmask 1043456
    %v96 = vsel %vm94, %v37, 0
    %98 = vmatprep.subr.mxu0 0.0
    %99 = vmatpush1.msra.mxu0 0.0
    %100 = vmatprep.subr.mxu0 0.0
    %101 = vmatpush1.msra.mxu0 0.0
    %102 = vmatprep.subr.mxu0 0.0
    %103 = vmatpush1.msra.mxu0 0.0
    %104 = vmatprep.subr.mxu0 0.0
    %105 = vmatpush1.msra.mxu0 0.0
    %106 = vmatprep.subr.mxu0 0.0
    %107 = vmatpush1.msra.mxu0 0.0
    %108 = vmatprep.subr.mxu0 0.0
    %109 = vmatpush1.msra.mxu0 0.0
    %110 = vmatprep.subr.mxu0 0.0
    %111 = vmatpush1.msra.mxu0 0.0
    %112 = vmatprep.subr.mxu0 0.0
    %113 = vmatpush1.msra.mxu0 0.0
    %114 = vmatprep.subr.mxu0 0.0
    %115 = vmatpush1.msra.mxu0 0.0
    %116 = vmatprep.subr.mxu0 0.0
    %117 = vmatpush1.msra.mxu0 0.0
    %118 = vmatprep.subr.mxu0 0.0
    %119 = vmatpush1.msra.mxu0 0.0
    %120 = vmatprep.subr.mxu0 0.0
    %121 = vmatpush1.msra.mxu0 0.0
    %122 = vmatprep.subr.mxu0 0.0
    %123 = vmatpush1.msra.mxu0 0.0
    %124 = vmatprep.subr.mxu0 0.0
    %125 = vmatpush1.msra.mxu0 0.0
    %126 = vmatprep.subr.mxu0 0.0
    %127 = vmatpush1.msra.mxu0 0.0
    %128 = vmatprep.subr.mxu0 0.0
    %129 = vmatpush1.msra.mxu0 %v96
    %130 = vmatprep.subr.mxu0 0.0
    %131 = vmatpush2.msra.mxu0 0.0
    %132 = vmatprep.subr.mxu0 0.0
    %133 = vmatpush2.msra.mxu0 0.0
    %134 = vmatprep.subr.mxu0 0.0
    %135 = vmatpush2.msra.mxu0 0.0
    %136 = vmatprep.subr.mxu0 0.0
    %137 = vmatpush2.msra.mxu0 0.0
    %138 = vmatprep.subr.mxu0 0.0
    %139 = vmatpush2.msra.mxu0 0.0
    %140 = vmatprep.subr.mxu0 0.0
    %141 = vmatpush2.msra.mxu0 0.0
    %142 = vmatprep.subr.mxu0 0.0
    %143 = vmatpush2.msra.mxu0 0.0
    %144 = vmatprep.subr.mxu0 0.0
    %145 = vmatpush2.msra.mxu0 0.0
    %146 = vmatprep.subr.mxu0 0.0
    %147 = vmatpush2.msra.mxu0 0.0
    %148 = vmatprep.subr.mxu0 0.0
    %149 = vmatpush2.msra.mxu0 0.0
    %150 = vmatprep.subr.mxu0 0.0
    %151 = vmatpush2.msra.mxu0 0.0
    %152 = vmatprep.subr.mxu0 0.0
    %153 = vmatpush2.msra.mxu0 0.0
    %154 = vmatprep.subr.mxu0 0.0
    %155 = vmatpush2.msra.mxu0 0.0
    %156 = vmatprep.subr.mxu0 0.0
    %157 = vmatpush2.msra.mxu0 0.0
    %158 = vmatprep.subr.mxu0 0.0
    %159 = vmatpush2.msra.mxu0 0.0
    %160 = vmatprep.subr.mxu0 0.0
    %161 = vmatpush2.msra.mxu0 0.0
    %162 = vmatprep.mubr.f32.mxu0 0.0
    %163 = vmatmul.mubr.f32.gmra.mxu0 %v47
    %v164 = vpop.f32.mrf.mxu0
    %v165 = vadd.f32 %v43, %v164
    %v166 = vpop.f32.mrf.mxu0
    %167 = vmatprep.mubr.f32.mxu0 0.0
    %168 = vmatmul.mubr.f32.gmra.mxu0 %v50
    %v169 = vpop.f32.mrf.mxu0
    %v170 = vadd.f32 %v43, %v169
    %v171 = vpop.f32.mrf.mxu0
    %172 = vmatprep.mubr.f32.mxu0 0.0
    %173 = vmatmul.mubr.f32.gmra.mxu0 %v53
    %v174 = vpop.f32.mrf.mxu0
    %v175 = vadd.f32 %v43, %v174
    %v176 = vpop.f32.mrf.mxu0
    %177 = vmatprep.mubr.f32.mxu0 0.0
    %178 = vmatmul.mubr.f32.gmra.mxu0 %v56
    %v179 = vpop.f32.mrf.mxu0
    %v180 = vadd.f32 %v43, %v179
    %v181 = vpop.f32.mrf.mxu0
    %182 = vmatprep.mubr.f32.mxu0 0.0
    %183 = vmatmul.mubr.f32.gmra.mxu0 %v59
    %v184 = vpop.f32.mrf.mxu0
    %v185 = vadd.f32 %v43, %v184
    %v186 = vpop.f32.mrf.mxu0
    %187 = vmatprep.mubr.f32.mxu0 0.0
    %188 = vmatmul.mubr.f32.gmra.mxu0 %v62
    %v189 = vpop.f32.mrf.mxu0
    %v190 = vadd.f32 %v43, %v189
    %v191 = vpop.f32.mrf.mxu0
    %192 = vmatprep.mubr.f32.mxu0 0.0
    %193 = vmatmul.mubr.f32.gmra.mxu0 %v65
    %v194 = vpop.f32.mrf.mxu0
    %v195 = vadd.f32 %v43, %v194
    %v196 = vpop.f32.mrf.mxu0
    %197 = vmatprep.mubr.f32.mxu0 0.0
    %198 = vmatmul.mubr.f32.gmra.mxu0 %v68
    %v199 = vpop.f32.mrf.mxu0
    %v200 = vadd.f32 %v43, %v199
    %v201 = vpop.f32.mrf.mxu0
    %202 = vmatprep.mubr.f32.mxu0 0.0
    %203 = vmatmul.mubr.f32.gmra.mxu0 %v71
    %v204 = vpop.f32.mrf.mxu0
    %v205 = vadd.f32 %v43, %v204
    %v206 = vpop.f32.mrf.mxu0
    %207 = vmatprep.mubr.f32.mxu0 0.0
    %208 = vmatmul.mubr.f32.gmra.mxu0 %v74
    %v209 = vpop.f32.mrf.mxu0
    %v210 = vadd.f32 %v43, %v209
    %v211 = vpop.f32.mrf.mxu0
    %212 = vmatprep.mubr.f32.mxu0 0.0
    %213 = vmatmul.mubr.f32.gmra.mxu0 %v77
    %v214 = vpop.f32.mrf.mxu0
    %v215 = vadd.f32 %v43, %v214
    %v216 = vpop.f32.mrf.mxu0
    %217 = vmatprep.mubr.f32.mxu0 0.0
    %218 = vmatmul.mubr.f32.gmra.mxu0 %v80
    %v219 = vpop.f32.mrf.mxu0
    %v220 = vadd.f32 %v43, %v219
    %v221 = vpop.f32.mrf.mxu0
    %222 = vmatprep.mubr.f32.mxu0 0.0
    %223 = vmatmul.mubr.f32.gmra.mxu0 %v83
    %v224 = vpop.f32.mrf.mxu0
    %v225 = vadd.f32 %v43, %v224
    %v226 = vpop.f32.mrf.mxu0
    %227 = vmatprep.mubr.f32.mxu0 0.0
    %228 = vmatmul.mubr.f32.gmra.mxu0 %v86
    %v229 = vpop.f32.mrf.mxu0
    %v230 = vadd.f32 %v43, %v229
    %v231 = vpop.f32.mrf.mxu0
    %232 = vmatprep.mubr.f32.mxu0 0.0
    %233 = vmatmul.mubr.f32.gmra.mxu0 %v89
    %v234 = vpop.f32.mrf.mxu0
    %v235 = vadd.f32 %v43, %v234
    %v236 = vpop.f32.mrf.mxu0
    %237 = vmatprep.mubr.f32.mxu0 0.0
    %238 = vmatmul.mubr.f32.gmra.mxu0 %v92
    %v239 = vpop.f32.mrf.mxu0
    %v240 = vadd.f32 %v43, %v239
    %v241 = vpop.f32.mrf.mxu0
    %242 = vdwg.mxu0
    %v243 = vmax.f32 %v165, 0.0
    %v244 = vmax.f32 %v170, 0.0
    %v245 = vmax.f32 %v175, 0.0
    %v246 = vmax.f32 %v180, 0.0
    %v247 = vmax.f32 %v185, 0.0
    %v248 = vmax.f32 %v190, 0.0
    %v249 = vmax.f32 %v195, 0.0
    %v250 = vmax.f32 %v200, 0.0
    %v251 = vmax.f32 %v205, 0.0
    %v252 = vmax.f32 %v210, 0.0
    %v253 = vmax.f32 %v215, 0.0
    %v254 = vmax.f32 %v220, 0.0
    %v255 = vmax.f32 %v225, 0.0
    %v256 = vmax.f32 %v230, 0.0
    %v257 = vmax.f32 %v235, 0.0
    %v258 = vmax.f32 %v240, 0.0
    %v259 = vld [vmem:[%s3] sm:$0xff]
    %v260 = vld [vmem:[%s4] sm:$0xff]
    %262 = vset.pattern.permute.xlu0 0
    %263 = vperm.xlu0 %262, %v260
    %v264 = vpop.permute.xlu0 %263
    %266 = vmatprep.subr.mxu0 0.0
    %267 = vmatpush1.xpose.msra.mxu0 %v258
    %268 = vmatprep.subr.mxu0 0.0
    %269 = vmatpush1.xpose.msra.mxu0 %v257
    %270 = vmatprep.subr.mxu0 0.0
    %271 = vmatpush1.xpose.msra.mxu0 %v256
    %272 = vmatprep.subr.mxu0 0.0
    %273 = vmatpush1.xpose.msra.mxu0 %v255
    %274 = vmatprep.subr.mxu0 0.0
    %275 = vmatpush1.xpose.msra.mxu0 %v254
    %276 = vmatprep.subr.mxu0 0.0
    %277 = vmatpush1.xpose.msra.mxu0 %v253
    %278 = vmatprep.subr.mxu0 0.0
    %279 = vmatpush1.xpose.msra.mxu0 %v252
    %280 = vmatprep.subr.mxu0 0.0
    %281 = vmatpush1.xpose.msra.mxu0 %v251
    %282 = vmatprep.subr.mxu0 0.0
    %283 = vmatpush1.xpose.msra.mxu0 %v250
    %284 = vmatprep.subr.mxu0 0.0
    %285 = vmatpush1.xpose.msra.mxu0 %v249
    %286 = vmatprep.subr.mxu0 0.0
    %287 = vmatpush1.xpose.msra.mxu0 %v248
    %288 = vmatprep.subr.mxu0 0.0
    %289 = vmatpush1.xpose.msra.mxu0 %v247
    %290 = vmatprep.subr.mxu0 0.0
    %291 = vmatpush1.xpose.msra.mxu0 %v246
    %292 = vmatprep.subr.mxu0 0.0
    %293 = vmatpush1.xpose.msra.mxu0 %v245
    %294 = vmatprep.subr.mxu0 0.0
    %295 = vmatpush1.xpose.msra.mxu0 %v244
    %296 = vmatprep.subr.mxu0 0.0
    %297 = vmatpush1.xpose.msra.mxu0 %v243
    %298 = vmatprep.subr.mxu0 0.0
    %299 = vmatpush2.xpose.msra.mxu0 0.0
    %300 = vmatprep.subr.mxu0 0.0
    %301 = vmatpush2.xpose.msra.mxu0 0.0
    %302 = vmatprep.subr.mxu0 0.0
    %303 = vmatpush2.xpose.msra.mxu0 0.0
    %304 = vmatprep.subr.mxu0 0.0
    %305 = vmatpush2.xpose.msra.mxu0 0.0
    %306 = vmatprep.subr.mxu0 0.0
    %307 = vmatpush2.xpose.msra.mxu0 0.0
    %308 = vmatprep.subr.mxu0 0.0
    %309 = vmatpush2.xpose.msra.mxu0 0.0
    %310 = vmatprep.subr.mxu0 0.0
    %311 = vmatpush2.xpose.msra.mxu0 0.0
    %312 = vmatprep.subr.mxu0 0.0
    %313 = vmatpush2.xpose.msra.mxu0 0.0
    %314 = vmatprep.subr.mxu0 0.0
    %315 = vmatpush2.xpose.msra.mxu0 0.0
    %316 = vmatprep.subr.mxu0 0.0
    %317 = vmatpush2.xpose.msra.mxu0 0.0
    %318 = vmatprep.subr.mxu0 0.0
    %319 = vmatpush2.xpose.msra.mxu0 0.0
    %320 = vmatprep.subr.mxu0 0.0
    %321 = vmatpush2.xpose.msra.mxu0 0.0
    %322 = vmatprep.subr.mxu0 0.0
    %323 = vmatpush2.xpose.msra.mxu0 0.0
    %324 = vmatprep.subr.mxu0 0.0
    %325 = vmatpush2.xpose.msra.mxu0 0.0
    %326 = vmatprep.subr.mxu0 0.0
    %327 = vmatpush2.xpose.msra.mxu0 0.0
    %328 = vmatprep.subr.mxu0 0.0
    %329 = vmatpush2.xpose.msra.mxu0 0.0
    %330 = vmatprep.mubr.f32.mxu0 0.0
    %331 = vmatmul.mubr.f32.gmra.mxu0 %v259
    %v332 = vpop.f32.mrf.mxu0
    %v333 = vadd.f32 %v264, %v332
    %v334 = vpop.f32.mrf.mxu0
    %335 = vdwg.mxu0
    %v336 = vlaneseq
    %v337 = vshrl.u32 %v336, 7
    %vm338 = vcmp.lt.s32.totalorder %v337, 2
    %v339 = vsel %vm338, %v333, -1e+30
    %v340 = vrot.slane %v339, 4
    %v341 = vmax.f32 %v339, %v340
    %v342 = vrot.slane %v341, 2
    %v343 = vmax.f32 %v341, %v342
    %v344 = vrot.slane %v343, 1
    %v345 = vmax.f32 %v343, %v344
    %v346 = vsub.f32 %v339, %v345
    %v347 = vmul.f32 %v346, 1.442695
    %v348 = vpow.pop %v347
    %v349 = vrot.slane %v348, 4
    %v350 = vadd.f32 %v348, %v349
    %v351 = vrot.slane %v350, 2
    %v352 = vadd.f32 %v350, %v351
    %v353 = vrot.slane %v352, 1
    %v354 = vadd.f32 %v352, %v353
    %v355 = vrcp.pop %v354
    %v356 = vmul.f32 %v348, %v355
    %vm357 = vcmp.eq.s32.totalorder %v337, 2
    %v358 = vsel %vm357, %v333, %v356
    %359 = vst [vmem:[#allocation2] sm:$0xff] %v358
    // Predicated region
    $region22: #{tpu_custom_call.1} parent=1 // pred_check
      _
    $region23: #{tpu_custom_call.1} parent=1 // pred_check_branch
      %361 = sbr.rel (0) target = $region25
    $region24: #{tpu_custom_call.1} parent=1 // pred_region
      %s363 = ssub.s32 128, 128
      %364 = vsyncadd [#allocation3], %s363
      %s366 = sshll.u32 [#allocation2], 4
      %s367 = int_to_ptr.vmem [resolvable:$true] %s366
      %369 = dma.vmem_to_hbm [thread:$0]  %s367, 128, %s5, [#allocation3]
    $region25: #{tpu_custom_call.1} parent=1 // pred_fallthru
      _
    // Predicated region
    $region26: #{tpu_custom_call.1} parent=1 // pred_check
      _
    $region27: #{tpu_custom_call.1} parent=1 // pred_check_branch
      %371 = sbr.rel (0) target = $region29
    $region28: #{tpu_custom_call.1} parent=1 // pred_region
      %372 = dma.done [#allocation3], 128
    $region29: #{tpu_custom_call.1} parent=1 // pred_fallthru
      _
    %373 = vsyncpa [#allocation3], 1

</llo_original>
